<compile_context>
chip_gen: v5e
topology: v5e:2x2
jax: 0.10.0
libtpu: 0.0.40
codegen_flags: <defaults>
</compile_context>

<pallas_src>
import math
import functools

import jax
import jax.numpy as jnp
from jax.experimental import pallas as pl
from jax.experimental.pallas import tpu as pltpu


def make_positional_encoding(max_len, d_model):
    """Deterministic pe buffer, identical to the PyTorch __init__ construction."""
    position = jnp.arange(max_len, dtype=jnp.float32)[:, None]               # (L, 1)
    div_term = jnp.exp(
        jnp.arange(0, d_model, 2, dtype=jnp.float32) * (-math.log(10000.0) / d_model)
    )                                                                         # (D/2,)
    pe = jnp.zeros((max_len, d_model), jnp.float32)
    pe = pe.at[:, 0::2].set(jnp.sin(position * div_term))
    pe = pe.at[:, 1::2].set(jnp.cos(position * div_term))
    return pe[:, None, :]  # (max_len, 1, d_model)


def _pe_dropout_kernel(seed_ref, x_ref, pe_ref, o_ref, *, p, training, batch, d_model,
                       tile_s):
    # x_ref / o_ref: (TILE_S, B*D) lane-dense slab (free reshape in the wrapper).
    # pe_ref:        (TILE_S, D)  — pe is never pre-broadcast in HBM; it is widened
    #                               across the batch chunks in VMEM (lane concat).
    pe = pe_ref[...]
    if batch > 1:
        pe_wide = jnp.concatenate([pe] * batch, axis=-1)      # (TILE_S, B*D)
    else:
        pe_wide = pe
    y = x_ref[...].astype(jnp.float32) + pe_wide

    if training and p > 0.0:
        # Stateless per-element hash RNG (pure jnp integer ops — no pltpu.prng_*,
        # so it lowers on TPU *and* runs under interpret mode). Hash of the global
        # element index => every grid tile gets an independent, grid-invariant mask.
        i = pl.program_id(0)
        rows = jax.lax.broadcasted_iota(jnp.int32, y.shape, 0)
        cols = jax.lax.broadcasted_iota(jnp.int32, y.shape, 1)
        width = y.shape[1]
        gidx = ((i * tile_s + rows) * width + cols).astype(jnp.uint32)
        h = gidx ^ (seed_ref[0].astype(jnp.uint32) * jnp.uint32(0x9E3779B9))
        # murmur3 fmix32 finalizer
        h = h ^ (h >> jnp.uint32(16))
        h = h * jnp.uint32(0x7FEB352D)
        h = h ^ (h >> jnp.uint32(15))
        h = h * jnp.uint32(0x846CA68B)
        h = h ^ (h >> jnp.uint32(16))
        # Direct integer-threshold compare (no float-uniform construction):
        # keep with prob (1-p), scale kept values by 1/(1-p) (torch.nn.Dropout).
        r = (h >> jnp.uint32(8)).astype(jnp.int32)            # 24 random bits, >= 0
        thr = jnp.int32(int(p * (1 << 24)))
        keep = r >= thr
        y = jnp.where(keep, y * jnp.float32(1.0 / (1.0 - p)), 0.0)

    o_ref[...] = y.astype(o_ref.dtype)


def _choose_tile_s(seq_len, row_bytes, target_bytes=2 * 1024 * 1024):
    """Biggest sequence tile with <= ~2 MiB per buffer (safe w/ double buffering on
    all of v5e/v6e/v7x), rounded to a multiple of 8 sublanes unless it covers S."""
    t = max(8, min(seq_len, target_bytes // max(row_bytes, 1)))
    if t >= seq_len:
        return seq_len
    return max(8, (t // 8) * 8)


def positional_encoding_forward(x, pe, *, p=0.1, training=True, seed=0, tile_s=None):
    """x: (S, B, D) float32; pe: (max_len, 1, D). Returns (S, B, D)."""
    S, B, D = x.shape
    max_len = pe.shape[0]
    if S > max_len:
        raise ValueError(f"sequence length {S} exceeds positional-encoding max_len {max_len}")

    pe_s = pe[:S, 0, :]                      # (S, D) — never pre-broadcast over batch
    x2 = x.reshape(S, B * D)                 # free, layout-preserving lane-dense slab

    if tile_s is None:
        tile_s = _choose_tile_s(S, B * D * 4)
    tile_s = min(int(tile_s), S)
    if tile_s < S:
        tile_s = max(8, (tile_s // 8) * 8)   # keep the (8, 128) block rule satisfied
    grid = (pl.cdiv(S, tile_s),)

    seed_arr = jnp.asarray([seed], dtype=jnp.int32)
    kernel = functools.partial(
        _pe_dropout_kernel, p=float(p), training=bool(training),
        batch=B, d_model=D, tile_s=tile_s,
    )

    out2 = pl.pallas_call(
        kernel,
        out_shape=jax.ShapeDtypeStruct((S, B * D), x.dtype),
        grid=grid,
        in_specs=[
            pl.BlockSpec(memory_space=pltpu.MemorySpace.SMEM),     # seed scalar
            pl.BlockSpec((tile_s, B * D), lambda i: (i, 0)),       # x slab tile
            pl.BlockSpec((tile_s, D), lambda i: (i, 0)),           # pe tile
        ],
        out_specs=pl.BlockSpec((tile_s, B * D), lambda i: (i, 0)),
        compiler_params=pltpu.CompilerParams(
            dimension_semantics=("parallel",),        # shards seq tiles across TCs (v7x)
            vmem_limit_bytes=32 * 1024 * 1024,        # explicit; safe on v5e/v6e/v7x
        ),
    )(seed_arr, x2, pe_s)
    return out2.reshape(S, B, D)


if __name__ == "__main__":
    # Small shapes consistent with the module: seq=8, batch=2, d_model=32.
    S, B, D = 8, 2, 32
    MAX_LEN = 64
    P_DROP = 0.1

    key = jax.random.PRNGKey(0)
    x = jax.random.normal(key, (S, B, D), dtype=jnp.float32)
    pe = make_positional_encoding(MAX_LEN, D)

    # 1) Deterministic check (dropout disabled == eval-mode forward).
    out_eval = jax.block_until_ready(
        positional_encoding_forward(x, pe, p=P_DROP, training=False)
    )
    ref_eval = x + pe[:S]
    assert out_eval.shape == (S, B, D)
    assert jnp.allclose(out_eval, ref_eval, atol=1e-6, rtol=1e-6), "eval-mode mismatch"

    # 2) Training-mode forward with in-kernel dropout (deterministic seed).
    #    RNG stream differs from PyTorch's, but semantics (mask + 1/(1-p) scale) match.
    out_train = jax.block_until_ready(
        positional_encoding_forward(x, pe, p=P_DROP, training=True, seed=42)
    )
    assert out_train.shape == (S, B, D)
    scaled_ref = ref_eval / (1.0 - P_DROP)
    ok = jnp.logical_or(
        jnp.isclose(out_train, 0.0, atol=1e-6),
        jnp.isclose(out_train, scaled_ref, atol=1e-5, rtol=1e-5),
    )
    assert bool(jnp.all(ok)), "training-mode dropout values inconsistent"

    # 3) Multi-tile grid path (forces >1 grid step over the sequence axis).
    S2 = 24
    x_big = jax.random.normal(jax.random.PRNGKey(1), (S2, B, D), dtype=jnp.float32)
    out_big = jax.block_until_ready(
        positional_encoding_forward(x_big, pe, p=P_DROP, training=False, tile_s=8)
    )
    assert jnp.allclose(out_big, x_big + pe[:S2], atol=1e-6, rtol=1e-6), "tiled eval mismatch"

    print("KERNEL_OK")
</pallas_src>

<mosaic_0001>
module attributes {stable_mosaic.version = 11 : i64} {
  func.func @_pe_dropout_kernel(%arg0: i32, %arg1: memref<1xi32, #tpu.memory_space<smem>>, %arg2: memref<8x64xf32, #tpu.memory_space<vmem>>, %arg3: memref<8x32xf32, #tpu.memory_space<vmem>>, %arg4: memref<8x64xf32, #tpu.memory_space<vmem>>) attributes {dimension_semantics = [#tpu.dimension_semantics<parallel>], iteration_bounds = array<i64: 1>, scalar_prefetch = 0 : i64, scratch_operands = 0 : i64, tpu.core_type = #tpu.core_type<tc>, window_params = [{transform_indices = @transform_0, window_bounds = array<i64: 1>}, {transform_indices = @transform_1, window_bounds = array<i64: 8, 64>}, {transform_indices = @transform_2, window_bounds = array<i64: 8, 32>}, {transform_indices = @transform_3, window_bounds = array<i64: 8, 64>}]} {
    %c0 = arith.constant 0 : index
    %c0_0 = arith.constant 0 : index
    %0 = vector.load %arg3[%c0, %c0_0] : memref<8x32xf32, #tpu.memory_space<vmem>>, vector<8x32xf32>
    %1 = tpu.concatenate %0, %0 in 1 : vector<8x32xf32>, vector<8x32xf32> -> vector<8x64xf32>
    %c0_1 = arith.constant 0 : index
    %c0_2 = arith.constant 0 : index
    %2 = vector.load %arg2[%c0_1, %c0_2] : memref<8x64xf32, #tpu.memory_space<vmem>>, vector<8x64xf32>
    %3 = arith.addf %2, %1 : vector<8x64xf32>
    %c0_3 = arith.constant 0 : index
    %c0_4 = arith.constant 0 : index
    %4 = vector.load %arg4[%c0_3, %c0_4] : memref<8x64xf32, #tpu.memory_space<vmem>>, vector<8x64xf32>
    tpu.vector_store %arg4[%c0_3, %c0_4], %3 {strides = array<i32>} : memref<8x64xf32, #tpu.memory_space<vmem>>, vector<8x64xf32>,
    return
  }
  func.func @transform_0(%arg0: i32) -> i32 {
    %c0_i32 = arith.constant 0 : i32
    %c0_i32_0 = arith.constant 0 : i32
    return %c0_i32 : i32
  }
  func.func @transform_1(%arg0: i32) -> (i32, i32) {
    %c0_i32 = arith.constant 0 : i32
    %c0_i32_0 = arith.constant 0 : i32
    return %arg0, %c0_i32 : i32, i32
  }
  func.func @transform_2(%arg0: i32) -> (i32, i32) {
    %c0_i32 = arith.constant 0 : i32
    %c0_i32_0 = arith.constant 0 : i32
    return %arg0, %c0_i32 : i32, i32
  }
  func.func @transform_3(%arg0: i32) -> (i32, i32) {
    %c0_i32 = arith.constant 0 : i32
    %c0_i32_0 = arith.constant 0 : i32
    return %arg0, %c0_i32 : i32, i32
  }
}

</mosaic_0001>

<llo_original>
// kernel: tpu_custom_call.1
$region0: #{tpu_custom_call.1}
  #allocation0 [shape = 'u32[]', space=smem, size = 0x4, offset = 0x4, fixed_abs, tag = 'smem constant byte address 0x4 - core index']
  #allocation1 [shape = 'u32[72,128]{1,0:T(1,128)}', space=vmem, size = 0x9000, scoped, tag = 'internal scratch']
  #allocation2 [shape = 's32[1]{0:T(128)S(6)}', space=smem, size = 0x200, scoped, tag = 'scoped memory for tpu_custom_call.1']
  %s0 = inlined_call_operand.<no memory space> [shape: s32[1], index: 0, kind: input, shape index: {}]
  %s1 = inlined_call_operand.hbm [shape: f32[8,64], index: 1, kind: input, shape index: {}]
  %s2 = inlined_call_operand.hbm [shape: f32[8,32], index: 2, kind: input, shape index: {}]
  %s3 = inlined_call_operand.hbm [shape: f32[8,64], index: 3, kind: output, shape index: {}]
  %s4 = sld [smem:[#allocation0]]
  $region30: #{tpu_custom_call.1} parent=0
    _
  %s6 = ssub.s32 1, %s4
  %s7 = scalar_select 0, %s6, %s4
  %8 = sst [smem:[#allocation2]] %s0
  $region1: #{tpu_custom_call.1} parent=0
    #allocation3 [shape = 'u8[4096]{0}', space=vmem, size = 0x1000, scoped, tag = 'input window, operand 1, single buffered']
    #allocation4 [shape = 's32[1]{0}', space=sflag, size = 0x4, scoped, tag = 'scoped memory for tpu_custom_call.1']
    #allocation5 [shape = 's32[1]{0}', space=sflag, size = 0x4, scoped, tag = 'scoped memory for tpu_custom_call.1']
    #allocation6 [shape = 'u8[4096]{0}', space=vmem, size = 0x1000, scoped, tag = 'input window, operand 2, single buffered']
    #allocation7 [shape = 's32[1]{0}', space=sflag, size = 0x4, scoped, tag = 'scoped memory for tpu_custom_call.1']
    #allocation8 [shape = 'u8[4096]{0}', space=vmem, size = 0x1000, scoped, tag = 'output window, operand 0, single buffered']
    %9 = vsyncpa [#allocation4], 0
    %10 = vsyncpa [#allocation7], 0
    %11 = vsyncpa [#allocation5], 0
    // Predicated region
    $region2: #{tpu_custom_call.1} parent=1 // pred_check
      _
    $region3: #{tpu_custom_call.1} parent=1 // pred_check_branch
      %13 = sbr.rel (0) target = $region5
    $region4: #{tpu_custom_call.1} parent=1 // pred_region
      _
    $region5: #{tpu_custom_call.1} parent=1 // pred_fallthru
      _
    // Predicated region
    $region6: #{tpu_custom_call.1} parent=1 // pred_check
      _
    $region7: #{tpu_custom_call.1} parent=1 // pred_check_branch
      %15 = sbr.rel (0) target = $region9
    $region8: #{tpu_custom_call.1} parent=1 // pred_region
      %17 = vsyncadd [#allocation4], 0
      %s19 = sshll.u32 %s1, 4
      %s20 = int_to_ptr.hbm [resolvable:$true] %s19
      %s21 = sshll.u32 [#allocation3], 4
      %s22 = int_to_ptr.vmem [resolvable:$true] %s21
      %24 = dma.hbm_to_vmem [thread:$0]  %s20, 128, %s22, [#allocation4]
    $region9: #{tpu_custom_call.1} parent=1 // pred_fallthru
      _
    // Predicated region
    $region10: #{tpu_custom_call.1} parent=1 // pred_check
      _
    $region11: #{tpu_custom_call.1} parent=1 // pred_check_branch
      %26 = sbr.rel (0) target = $region13
    $region12: #{tpu_custom_call.1} parent=1 // pred_region
      %28 = vsyncadd [#allocation7], 0
      %s30 = sshll.u32 %s2, 4
      %s31 = int_to_ptr.hbm [resolvable:$true] %s30
      %s32 = sshll.u32 [#allocation6], 4
      %s33 = int_to_ptr.vmem [resolvable:$true] %s32
      %35 = dma.hbm_to_vmem [thread:$0]  %s31, 128, %s33, [#allocation7]
    $region13: #{tpu_custom_call.1} parent=1 // pred_fallthru
      _
    // Predicated region
    $region14: #{tpu_custom_call.1} parent=1 // pred_check
      _
    $region15: #{tpu_custom_call.1} parent=1 // pred_check_branch
      %37 = sbr.rel (0) target = $region17
    $region16: #{tpu_custom_call.1} parent=1 // pred_region
      %39 = dma.done [#allocation4], 128
    $region17: #{tpu_custom_call.1} parent=1 // pred_fallthru
      _
    // Predicated region
    $region18: #{tpu_custom_call.1} parent=1 // pred_check
      _
    $region19: #{tpu_custom_call.1} parent=1 // pred_check_branch
      %41 = sbr.rel (0) target = $region21
    $region20: #{tpu_custom_call.1} parent=1 // pred_region
      %43 = dma.done [#allocation7], 128
    $region21: #{tpu_custom_call.1} parent=1 // pred_fallthru
      _
    %v44 = vld [vmem:[#allocation6] sm:$0xff]
    %46 = vrot.lane.b32.xlu0 %v44, 32
    %v47 = vpop.permute.xlu0 %46
    %vm49 = vcmask 261120
    %v50 = vsel %vm49, %v44, %v47
    %v51 = vld [vmem:[#allocation3] sm:$0xff]
    %v52 = vadd.f32 %v51, %v50
    %vm53 = vcmask 523264
    %54 = vst.msk [vmem:[#allocation8] sm:$0xff] %vm53, %v52
    // Predicated region
    $region22: #{tpu_custom_call.1} parent=1 // pred_check
      _
    $region23: #{tpu_custom_call.1} parent=1 // pred_check_branch
      %56 = sbr.rel (0) target = $region25
    $region24: #{tpu_custom_call.1} parent=1 // pred_region
      %58 = vsyncadd [#allocation5], 0
      %s60 = sshll.u32 [#allocation8], 4
      %s61 = int_to_ptr.vmem [resolvable:$true] %s60
      %s62 = sshll.u32 %s3, 4
      %s63 = int_to_ptr.hbm [resolvable:$true] %s62
      %65 = dma.vmem_to_hbm [thread:$0]  %s61, 128, %s63, [#allocation5]
    $region25: #{tpu_custom_call.1} parent=1 // pred_fallthru
      _
    // Predicated region
    $region26: #{tpu_custom_call.1} parent=1 // pred_check
      _
    $region27: #{tpu_custom_call.1} parent=1 // pred_check_branch
      %67 = sbr.rel (0) target = $region29
    $region28: #{tpu_custom_call.1} parent=1 // pred_region
      %69 = dma.done [#allocation5], 128
    $region29: #{tpu_custom_call.1} parent=1 // pred_fallthru
      _
    %70 = vsyncpa [#allocation4], 1
    %71 = vsyncpa [#allocation7], 1
    %72 = vsyncpa [#allocation5], 1

</llo_original>
